<compile_context>
chip_gen: v6e
topology: v6e:2x2x1
jax: 0.10.0
libtpu: 0.0.40
codegen_flags: <defaults>
</compile_context>

<pallas_src>
import jax
import jax.numpy as jnp
from jax.experimental import pallas as pl
from jax.experimental.pallas import tpu as pltpu

_LANE = 128
_SUBLANE = 8


def _vmem_budgets():
    """(block VMEM budget bytes, compiler vmem_limit_bytes), sized per chip generation."""
    try:
        cap = int(pltpu.get_tpu_info().vmem_capacity_bytes)
    except Exception:  # unknown chip / info unavailable -> stay conservative
        cap = 0
    if cap >= 96 * 1024 * 1024:
        # v5e / v6e: 128 MiB physical VMEM; leave headroom for Mosaic's own scratch.
        return 48 * 1024 * 1024, 80 * 1024 * 1024
    # v7x (64 MiB per TensorCore) or unknown.
    return 22 * 1024 * 1024, 44 * 1024 * 1024


def _choose_tile_h(H, B, T, W, in_itemsize, budget_bytes):
    """Largest H tile whose streamed inputs + f32 working set fit the VMEM budget."""
    lane_w = pl.cdiv(W, _LANE) * _LANE  # VMEM lane padding of the last dim
    # Per H row of one block:
    #   * the two streamed inputs, double-buffered, in their NATIVE dtype
    #   * the fused per-batch loop's f32 temporaries (t_b, clim, anom_real, o_b,
    #     anom_pred ~ 5*T rows) plus the 4 per-location f32 accumulators.
    stream_row = 2 * 2 * B * T * lane_w * in_itemsize
    work_row = (5 * T + 4) * lane_w * 4
    per_row = stream_row + work_row
    cap = max(_SUBLANE, (budget_bytes // per_row) // _SUBLANE * _SUBLANE)

    tile_h = H if H <= cap else cap  # full-dim block (any H) or a multiple of 8

    # Dual-TC (v7x) balance: prefer >= ~4 roughly even grid steps, but never shrink a
    # step below ~4 MiB streamed per input (per-step overhead would start to show).
    min_step_bytes = 4 * 1024 * 1024

    def _halved(th):
        return max(_SUBLANE, (th // 2) // _SUBLANE * _SUBLANE)

    while (tile_h > _SUBLANE and pl.cdiv(H, tile_h) < 4
           and B * T * _halved(tile_h) * W * in_itemsize >= min_step_bytes):
        tile_h = _halved(tile_h)
    return tile_h


def wacc_pallas(output, target, weights):
    """output, target: (B, T, H, W) in native dtype; weights: (H, 1) latitude weights."""
    assert output.shape == target.shape
    B, T, H, W = output.shape

    in_itemsize = jnp.dtype(output.dtype).itemsize
    block_budget, vmem_limit = _vmem_budgets()
    tile_h = _choose_tile_h(H, B, T, W, in_itemsize, block_budget)
    grid = (pl.cdiv(H, tile_h),)
    ragged = (H % tile_h) != 0
    inv_bt = 1.0 / float(B * T)

    def kernel(o_ref, t_ref, num_ref, d1_ref, d2_ref):
        # o_ref/t_ref: (B, T, tile_h, W) native dtype; outputs: (tile_h, W) f32
        acc_shape = num_ref.shape
        num_acc = jnp.zeros(acc_shape, jnp.float32)
        d1_acc = jnp.zeros(acc_shape, jnp.float32)
        d2_acc = jnp.zeros(acc_shape, jnp.float32)
        s_pred = jnp.zeros(acc_shape, jnp.float32)

        # Static small loop over batches: each (T, tile_h, W) chunk is cast to f32,
        # centered and reduced while hot -> no (B, T, tile_h, W) f32 slab ever exists.
        for b in range(B):
            t_b = t_ref[b].astype(jnp.float32)                      # (T, tile_h, W)
            clim = jnp.mean(t_b, axis=0, keepdims=True)             # per-batch climatology
            anom_real = t_b - clim                                  # == real_peaks exactly
            d2_acc = d2_acc + jnp.sum(anom_real * anom_real, axis=0)

            o_b = o_ref[b].astype(jnp.float32)
            anom_pred = o_b - clim
            num_acc = num_acc + jnp.sum(anom_pred * anom_real, axis=0)
            d1_acc = d1_acc + jnp.sum(anom_pred * anom_pred, axis=0)
            s_pred = s_pred + jnp.sum(anom_pred, axis=0)

        # pred_peaks = anom_pred - mean_{B,T}(anom_pred).  Per location,
        # sum_{b,t}(anom_real) == 0 so `num` needs no correction; d1 uses the exact
        # moment identity to eliminate pred_mean without a second pass.
        d1_full = d1_acc - s_pred * s_pred * inv_bt

        if ragged:
            # Last H tile overruns the array: zero invalid rows so unspecified input
            # data never reaches the (dropped) out-of-bounds output rows.
            h0 = pl.program_id(0) * tile_h
            rows = h0 + jax.lax.broadcasted_iota(jnp.int32, acc_shape, 0)
            valid = rows < H
            num_acc = jnp.where(valid, num_acc, 0.0)
            d1_full = jnp.where(valid, d1_full, 0.0)
            d2_acc = jnp.where(valid, d2_acc, 0.0)

        num_ref[...] = num_acc
        d1_ref[...] = d1_full
        d2_ref[...] = d2_acc

    out_sd = jax.ShapeDtypeStruct((H, W), jnp.float32)
    num_hw, d1_hw, d2_hw = pl.pallas_call(
        kernel,
        out_shape=(out_sd, out_sd, out_sd),
        grid_spec=pltpu.PrefetchScalarGridSpec(
            num_scalar_prefetch=0,
            grid=grid,
            in_specs=[
                pl.BlockSpec((B, T, tile_h, W), lambda i: (0, 0, i, 0)),  # prediction
                pl.BlockSpec((B, T, tile_h, W), lambda i: (0, 0, i, 0)),  # target
            ],
            out_specs=(
                pl.BlockSpec((tile_h, W), lambda i: (i, 0)),  # per-(h,w) num partials
                pl.BlockSpec((tile_h, W), lambda i: (i, 0)),  # per-(h,w) d1 partials
                pl.BlockSpec((tile_h, W), lambda i: (i, 0)),  # per-(h,w) d2 partials
            ),
        ),
        compiler_params=pltpu.CompilerParams(
            dimension_semantics=("parallel",),  # H tiles independent (dual-TC on v7x)
            vmem_limit_bytes=vmem_limit,
        ),
    )(output, target)

    # Tiny finalization in JAX: latitude weighting + global reduction over (H, W).
    w_col = jnp.reshape(weights, (H, 1)).astype(jnp.float32)
    num = jnp.sum(w_col * num_hw)
    d1 = jnp.sum(w_col * d1_hw)
    d2 = jnp.sum(w_col * d2_hw)
    acc = num * jax.lax.rsqrt(d1 * d2)
    return 1.0 - acc


def wacc_reference(output, target, weights):
    """Plain-JAX transcription of the PyTorch forward (for verification)."""
    clim = target.mean(axis=1)[:, None, :, :]
    anom_pred = output - clim
    anom_real = target - clim
    pred_peaks = anom_pred - anom_pred.mean(axis=1).mean(axis=0)
    real_peaks = anom_real - anom_real.mean(axis=1).mean(axis=0)
    num = (weights * pred_peaks * real_peaks).sum()
    den = jnp.sqrt(
        (weights * pred_peaks**2).sum() * (weights * real_peaks**2).sum()
    )
    return 1.0 - num / den


if __name__ == "__main__":
    # Small shapes consistent with the module: (B, T, H, W)
    B, T, H, W = 2, 4, 8, 16

    key = jax.random.PRNGKey(0)
    k_out, k_tgt = jax.random.split(key)
    output = jax.random.normal(k_out, (B, T, H, W), dtype=jnp.float32)
    target = jax.random.normal(k_tgt, (B, T, H, W), dtype=jnp.float32)

    # Deterministic latitude weights (cosine-latitude style), shape (H, 1).
    lat = jnp.linspace(-1.4, 1.4, H)
    weights = (jnp.cos(lat) / jnp.mean(jnp.cos(lat))).reshape(H, 1).astype(jnp.float32)

    loss = jax.jit(wacc_pallas)(output, target, weights)
    loss = jax.block_until_ready(loss)

    ref = wacc_reference(output, target, weights)
    assert jnp.allclose(loss, ref, atol=1e-5, rtol=1e-5), (loss, ref)

    print("KERNEL_OK")
</pallas_src>

<mosaic_0001>
module attributes {stable_mosaic.version = 11 : i64} {
  func.func @kernel(%arg0: i32, %arg1: memref<2x4x8x16xf32, #tpu.memory_space<vmem>>, %arg2: memref<2x4x8x16xf32, #tpu.memory_space<vmem>>, %arg3: memref<8x16xf32, #tpu.memory_space<vmem>>, %arg4: memref<8x16xf32, #tpu.memory_space<vmem>>, %arg5: memref<8x16xf32, #tpu.memory_space<vmem>>) attributes {dimension_semantics = [#tpu.dimension_semantics<parallel>], iteration_bounds = array<i64: 1>, scalar_prefetch = 0 : i64, scratch_operands = 0 : i64, tpu.core_type = #tpu.core_type<tc>, window_params = [{transform_indices = @transform_0, window_bounds = array<i64: 2, 4, 8, 16>}, {transform_indices = @transform_1, window_bounds = array<i64: 2, 4, 8, 16>}, {transform_indices = @transform_2, window_bounds = array<i64: 8, 16>}, {transform_indices = @transform_3, window_bounds = array<i64: 8, 16>}, {transform_indices = @transform_4, window_bounds = array<i64: 8, 16>}]} {
    %cst = arith.constant 0.000000e+00 : f32
    %0 = vector.broadcast %cst : f32 to vector<8x16xf32>
    %cst_0 = arith.constant 0.000000e+00 : f32
    %1 = vector.broadcast %cst_0 : f32 to vector<8x16xf32>
    %cst_1 = arith.constant 0.000000e+00 : f32
    %2 = vector.broadcast %cst_1 : f32 to vector<8x16xf32>
    %cst_2 = arith.constant 0.000000e+00 : f32
    %3 = vector.broadcast %cst_2 : f32 to vector<8x16xf32>
    %c0 = arith.constant 0 : index
    %c0_3 = arith.constant 0 : index
    %c0_4 = arith.constant 0 : index
    %c0_5 = arith.constant 0 : index
    %4 = vector.load %arg2[%c0, %c0_3, %c0_4, %c0_5] : memref<2x4x8x16xf32, #tpu.memory_space<vmem>>, vector<1x4x8x16xf32>
    %5 = vector.shape_cast %4 : vector<1x4x8x16xf32> to vector<4x8x16xf32>
    %cst_6 = arith.constant dense<0.000000e+00> : vector<8x16xf32>
    %6 = vector.multi_reduction <add>, %5, %cst_6 [0] : vector<4x8x16xf32> to vector<8x16xf32>
    %7 = vector.shape_cast %6 : vector<8x16xf32> to vector<1x8x16xf32>
    %cst_7 = arith.constant 4.000000e+00 : f32
    %8 = vector.broadcast %cst_7 : f32 to vector<1x8x16xf32>
    %9 = arith.divf %7, %8 : vector<1x8x16xf32>
    %10 = vector.broadcast %9 : vector<1x8x16xf32> to vector<4x8x16xf32>
    %11 = arith.subf %5, %10 : vector<4x8x16xf32>
    %12 = arith.mulf %11, %11 : vector<4x8x16xf32>
    %cst_8 = arith.constant dense<0.000000e+00> : vector<8x16xf32>
    %13 = vector.multi_reduction <add>, %12, %cst_8 [0] : vector<4x8x16xf32> to vector<8x16xf32>
    %14 = arith.addf %2, %13 : vector<8x16xf32>
    %c0_9 = arith.constant 0 : index
    %c0_10 = arith.constant 0 : index
    %c0_11 = arith.constant 0 : index
    %c0_12 = arith.constant 0 : index
    %15 = vector.load %arg1[%c0_9, %c0_10, %c0_11, %c0_12] : memref<2x4x8x16xf32, #tpu.memory_space<vmem>>, vector<1x4x8x16xf32>
    %16 = vector.shape_cast %15 : vector<1x4x8x16xf32> to vector<4x8x16xf32>
    %17 = vector.broadcast %9 : vector<1x8x16xf32> to vector<4x8x16xf32>
    %18 = arith.subf %16, %17 : vector<4x8x16xf32>
    %19 = arith.mulf %18, %11 : vector<4x8x16xf32>
    %cst_13 = arith.constant dense<0.000000e+00> : vector<8x16xf32>
    %20 = vector.multi_reduction <add>, %19, %cst_13 [0] : vector<4x8x16xf32> to vector<8x16xf32>
    %21 = arith.addf %0, %20 : vector<8x16xf32>
    %22 = arith.mulf %18, %18 : vector<4x8x16xf32>
    %cst_14 = arith.constant dense<0.000000e+00> : vector<8x16xf32>
    %23 = vector.multi_reduction <add>, %22, %cst_14 [0] : vector<4x8x16xf32> to vector<8x16xf32>
    %24 = arith.addf %1, %23 : vector<8x16xf32>
    %cst_15 = arith.constant dense<0.000000e+00> : vector<8x16xf32>
    %25 = vector.multi_reduction <add>, %18, %cst_15 [0] : vector<4x8x16xf32> to vector<8x16xf32>
    %26 = arith.addf %3, %25 : vector<8x16xf32>
    %c1 = arith.constant 1 : index
    %c0_16 = arith.constant 0 : index
    %c0_17 = arith.constant 0 : index
    %c0_18 = arith.constant 0 : index
    %27 = vector.load %arg2[%c1, %c0_16, %c0_17, %c0_18] : memref<2x4x8x16xf32, #tpu.memory_space<vmem>>, vector<1x4x8x16xf32>
    %28 = vector.shape_cast %27 : vector<1x4x8x16xf32> to vector<4x8x16xf32>
    %cst_19 = arith.constant dense<0.000000e+00> : vector<8x16xf32>
    %29 = vector.multi_reduction <add>, %28, %cst_19 [0] : vector<4x8x16xf32> to vector<8x16xf32>
    %30 = vector.shape_cast %29 : vector<8x16xf32> to vector<1x8x16xf32>
    %cst_20 = arith.constant 4.000000e+00 : f32
    %31 = vector.broadcast %cst_20 : f32 to vector<1x8x16xf32>
    %32 = arith.divf %30, %31 : vector<1x8x16xf32>
    %33 = vector.broadcast %32 : vector<1x8x16xf32> to vector<4x8x16xf32>
    %34 = arith.subf %28, %33 : vector<4x8x16xf32>
    %35 = arith.mulf %34, %34 : vector<4x8x16xf32>
    %cst_21 = arith.constant dense<0.000000e+00> : vector<8x16xf32>
    %36 = vector.multi_reduction <add>, %35, %cst_21 [0] : vector<4x8x16xf32> to vector<8x16xf32>
    %37 = arith.addf %14, %36 : vector<8x16xf32>
    %c1_22 = arith.constant 1 : index
    %c0_23 = arith.constant 0 : index
    %c0_24 = arith.constant 0 : index
    %c0_25 = arith.constant 0 : index
    %38 = vector.load %arg1[%c1_22, %c0_23, %c0_24, %c0_25] : memref<2x4x8x16xf32, #tpu.memory_space<vmem>>, vector<1x4x8x16xf32>
    %39 = vector.shape_cast %38 : vector<1x4x8x16xf32> to vector<4x8x16xf32>
    %40 = vector.broadcast %32 : vector<1x8x16xf32> to vector<4x8x16xf32>
    %41 = arith.subf %39, %40 : vector<4x8x16xf32>
    %42 = arith.mulf %41, %34 : vector<4x8x16xf32>
    %cst_26 = arith.constant dense<0.000000e+00> : vector<8x16xf32>
    %43 = vector.multi_reduction <add>, %42, %cst_26 [0] : vector<4x8x16xf32> to vector<8x16xf32>
    %44 = arith.addf %21, %43 : vector<8x16xf32>
    %45 = arith.mulf %41, %41 : vector<4x8x16xf32>
    %cst_27 = arith.constant dense<0.000000e+00> : vector<8x16xf32>
    %46 = vector.multi_reduction <add>, %45, %cst_27 [0] : vector<4x8x16xf32> to vector<8x16xf32>
    %47 = arith.addf %24, %46 : vector<8x16xf32>
    %cst_28 = arith.constant dense<0.000000e+00> : vector<8x16xf32>
    %48 = vector.multi_reduction <add>, %41, %cst_28 [0] : vector<4x8x16xf32> to vector<8x16xf32>
    %49 = arith.addf %26, %48 : vector<8x16xf32>
    %50 = arith.mulf %49, %49 : vector<8x16xf32>
    %cst_29 = arith.constant 1.250000e-01 : f32
    %51 = vector.broadcast %cst_29 : f32 to vector<8x16xf32>
    %52 = arith.mulf %50, %51 : vector<8x16xf32>
    %53 = arith.subf %47, %52 : vector<8x16xf32>
    %c0_30 = arith.constant 0 : index
    %c0_31 = arith.constant 0 : index
    %54 = vector.load %arg3[%c0_30, %c0_31] : memref<8x16xf32, #tpu.memory_space<vmem>>, vector<8x16xf32>
    tpu.vector_store %arg3[%c0_30, %c0_31], %44 {strides = array<i32>} : memref<8x16xf32, #tpu.memory_space<vmem>>, vector<8x16xf32>,
    %c0_32 = arith.constant 0 : index
    %c0_33 = arith.constant 0 : index
    %55 = vector.load %arg4[%c0_32, %c0_33] : memref<8x16xf32, #tpu.memory_space<vmem>>, vector<8x16xf32>
    tpu.vector_store %arg4[%c0_32, %c0_33], %53 {strides = array<i32>} : memref<8x16xf32, #tpu.memory_space<vmem>>, vector<8x16xf32>,
    %c0_34 = arith.constant 0 : index
    %c0_35 = arith.constant 0 : index
    %56 = vector.load %arg5[%c0_34, %c0_35] : memref<8x16xf32, #tpu.memory_space<vmem>>, vector<8x16xf32>
    tpu.vector_store %arg5[%c0_34, %c0_35], %37 {strides = array<i32>} : memref<8x16xf32, #tpu.memory_space<vmem>>, vector<8x16xf32>,
    return
  }
  func.func @transform_0(%arg0: i32) -> (i32, i32, i32, i32) {
    %c0_i32 = arith.constant 0 : i32
    %c0_i32_0 = arith.constant 0 : i32
    %c0_i32_1 = arith.constant 0 : i32
    %c0_i32_2 = arith.constant 0 : i32
    return %c0_i32, %c0_i32_0, %arg0, %c0_i32_1 : i32, i32, i32, i32
  }
  func.func @transform_1(%arg0: i32) -> (i32, i32, i32, i32) {
    %c0_i32 = arith.constant 0 : i32
    %c0_i32_0 = arith.constant 0 : i32
    %c0_i32_1 = arith.constant 0 : i32
    %c0_i32_2 = arith.constant 0 : i32
    return %c0_i32, %c0_i32_0, %arg0, %c0_i32_1 : i32, i32, i32, i32
  }
  func.func @transform_2(%arg0: i32) -> (i32, i32) {
    %c0_i32 = arith.constant 0 : i32
    %c0_i32_0 = arith.constant 0 : i32
    return %arg0, %c0_i32 : i32, i32
  }
  func.func @transform_3(%arg0: i32) -> (i32, i32) {
    %c0_i32 = arith.constant 0 : i32
    %c0_i32_0 = arith.constant 0 : i32
    return %arg0, %c0_i32 : i32, i32
  }
  func.func @transform_4(%arg0: i32) -> (i32, i32) {
    %c0_i32 = arith.constant 0 : i32
    %c0_i32_0 = arith.constant 0 : i32
    return %arg0, %c0_i32 : i32, i32
  }
}

</mosaic_0001>

<llo_original>
// kernel: wacc_pallas.1
$region0: #{wacc_pallas.1}
  #allocation0 [shape = 'u32[]', space=smem, size = 0x4, offset = 0x4, fixed_abs, tag = 'smem constant byte address 0x4 - core index']
  #allocation1 [shape = 'u32[144,128]{1,0:T(1,128)}', space=vmem, size = 0x12000, scoped, tag = 'internal scratch']
  %s0 = inlined_call_operand.hbm [shape: f32[2,4,8,16], index: 0, kind: input, shape index: {}]
  %s1 = inlined_call_operand.hbm [shape: f32[2,4,8,16], index: 1, kind: input, shape index: {}]
  %s2 = inlined_call_operand.vmem [shape: f32[8,16], index: 2, kind: output, shape index: {0}]
  %s3 = inlined_call_operand.vmem [shape: f32[8,16], index: 3, kind: output, shape index: {1}]
  %s4 = inlined_call_operand.vmem [shape: f32[8,16], index: 4, kind: output, shape index: {2}]
  %5 = xla_tuple %s2, %s3, %s4
  %s6 = sld [smem:[#allocation0]]
  $region42: #{wacc_pallas.1} parent=0
    _
  %s8 = ssub.s32 1, %s6
  %s9 = scalar_select 0, %s8, %s6
  $region1: #{wacc_pallas.1} parent=0
    #allocation2 [shape = 'u8[32768]{0}', space=vmem, size = 0x8000, scoped, tag = 'input window, operand 0, single buffered']
    #allocation3 [shape = 's32[1]{0}', space=sflag, size = 0x4, scoped, tag = 'scoped memory for wacc_pallas.1']
    #allocation4 [shape = 'u8[32768]{0}', space=vmem, size = 0x8000, scoped, tag = 'input window, operand 1, single buffered']
    #allocation5 [shape = 's32[1]{0}', space=sflag, size = 0x4, scoped, tag = 'scoped memory for wacc_pallas.1']
    %10 = vsyncpa [#allocation3], 0
    %11 = vsyncpa [#allocation5], 0
    // Predicated region
    $region2: #{wacc_pallas.1} parent=1 // pred_check
      _
    $region3: #{wacc_pallas.1} parent=1 // pred_check_branch
      %13 = sbr.rel (0) target = $region5
    $region4: #{wacc_pallas.1} parent=1 // pred_region
      %s15 = ssub.s32 1024, 1024
      %16 = vsyncadd [#allocation3], %s15
      %s17 = sshll.u32 [#allocation2], 4
      %s18 = int_to_ptr.vmem [resolvable:$true] %s17
      %23 = dma.hbm_to_vmem [thread:$0]  %s0, 1024, %s18, [#allocation3], 128, 128, 8
    $region5: #{wacc_pallas.1} parent=1 // pred_fallthru
      _
    // Predicated region
    $region6: #{wacc_pallas.1} parent=1 // pred_check
      _
    $region7: #{wacc_pallas.1} parent=1 // pred_check_branch
      %25 = sbr.rel (0) target = $region9
    $region8: #{wacc_pallas.1} parent=1 // pred_region
      %s27 = ssub.s32 1024, 1024
      %28 = vsyncadd [#allocation5], %s27
      %s29 = sshll.u32 [#allocation4], 4
      %s30 = int_to_ptr.vmem [resolvable:$true] %s29
      %35 = dma.hbm_to_vmem [thread:$0]  %s1, 1024, %s30, [#allocation5], 128, 128, 8
    $region9: #{wacc_pallas.1} parent=1 // pred_fallthru
      _
    // Predicated region
    $region10: #{wacc_pallas.1} parent=1 // pred_check
      _
    $region11: #{wacc_pallas.1} parent=1 // pred_check_branch
      %37 = sbr.rel (0) target = $region13
    $region12: #{wacc_pallas.1} parent=1 // pred_region
      %38 = dma.done [#allocation3], 1024
    $region13: #{wacc_pallas.1} parent=1 // pred_fallthru
      _
    // Predicated region
    $region14: #{wacc_pallas.1} parent=1 // pred_check
      _
    $region15: #{wacc_pallas.1} parent=1 // pred_check_branch
      %40 = sbr.rel (0) target = $region17
    $region16: #{wacc_pallas.1} parent=1 // pred_region
      %41 = dma.done [#allocation5], 1024
    $region17: #{wacc_pallas.1} parent=1 // pred_fallthru
      _
    %v42 = vld [vmem:[#allocation4] sm:$0xff]
    %v43 = vld [vmem:[#allocation4 + $0x8] sm:$0xff]
    %v44 = vld [vmem:[#allocation4 + $0x10] sm:$0xff]
    %v45 = vld [vmem:[#allocation4 + $0x18] sm:$0xff]
    %vm46 = vcmask 130048
    %v47 = vsel %vm46, %v42, 0.0
    %v48 = vsel %vm46, %v43, 0.0
    %v49 = vadd.f32 %v47, %v48
    %v50 = vsel %vm46, %v44, 0.0
    %v51 = vadd.f32 %v49, %v50
    %v52 = vsel %vm46, %v45, 0.0
    %v53 = vadd.f32 %v51, %v52
    %v54 = vrcp.pop 4.0
    %v55 = vmul.f32 %v53, %v54
    %v56 = vsub.f32 %v42, %v55
    %v57 = vsub.f32 %v43, %v55
    %v58 = vsub.f32 %v44, %v55
    %v59 = vsub.f32 %v45, %v55
    %v60 = vmul.f32 %v56, %v56
    %v61 = vmul.f32 %v57, %v57
    %v62 = vmul.f32 %v58, %v58
    %v63 = vmul.f32 %v59, %v59
    %v64 = vsel %vm46, %v60, 0.0
    %v65 = vsel %vm46, %v61, 0.0
    %v66 = vadd.f32 %v64, %v65
    %v67 = vsel %vm46, %v62, 0.0
    %v68 = vadd.f32 %v66, %v67
    %v69 = vsel %vm46, %v63, 0.0
    %v70 = vadd.f32 %v68, %v69
    %v71 = vadd.f32 %v70, 0.0
    %v72 = vld [vmem:[#allocation2] sm:$0xff]
    %v73 = vld [vmem:[#allocation2 + $0x8] sm:$0xff]
    %v74 = vld [vmem:[#allocation2 + $0x10] sm:$0xff]
    %v75 = vld [vmem:[#allocation2 + $0x18] sm:$0xff]
    %v76 = vsub.f32 %v72, %v55
    %v77 = vsub.f32 %v73, %v55
    %v78 = vsub.f32 %v74, %v55
    %v79 = vsub.f32 %v75, %v55
    %v80 = vmul.f32 %v76, %v56
    %v81 = vmul.f32 %v77, %v57
    %v82 = vmul.f32 %v78, %v58
    %v83 = vmul.f32 %v79, %v59
    %v84 = vsel %vm46, %v80, 0.0
    %v85 = vsel %vm46, %v81, 0.0
    %v86 = vadd.f32 %v84, %v85
    %v87 = vsel %vm46, %v82, 0.0
    %v88 = vadd.f32 %v86, %v87
    %v89 = vsel %vm46, %v83, 0.0
    %v90 = vadd.f32 %v88, %v89
    %v91 = vadd.f32 %v90, 0.0
    %v92 = vmul.f32 %v76, %v76
    %v93 = vmul.f32 %v77, %v77
    %v94 = vmul.f32 %v78, %v78
    %v95 = vmul.f32 %v79, %v79
    %v96 = vsel %vm46, %v92, 0.0
    %v97 = vsel %vm46, %v93, 0.0
    %v98 = vadd.f32 %v96, %v97
    %v99 = vsel %vm46, %v94, 0.0
    %v100 = vadd.f32 %v98, %v99
    %v101 = vsel %vm46, %v95, 0.0
    %v102 = vadd.f32 %v100, %v101
    %v103 = vadd.f32 %v102, 0.0
    %v104 = vsel %vm46, %v76, 0.0
    %v105 = vsel %vm46, %v77, 0.0
    %v106 = vadd.f32 %v104, %v105
    %v107 = vsel %vm46, %v78, 0.0
    %v108 = vadd.f32 %v106, %v107
    %v109 = vsel %vm46, %v79, 0.0
    %v110 = vadd.f32 %v108, %v109
    %v111 = vadd.f32 %v110, 0.0
    %s112 = scalar_lea.vmem [#allocation4], 32
    %v113 = vld [vmem:[%s112] sm:$0xff]
    %v114 = vld [vmem:[%s112 + $0x8] sm:$0xff]
    %v115 = vld [vmem:[%s112 + $0x10] sm:$0xff]
    %v116 = vld [vmem:[%s112 + $0x18] sm:$0xff]
    %v117 = vsel %vm46, %v113, 0.0
    %v118 = vsel %vm46, %v114, 0.0
    %v119 = vadd.f32 %v117, %v118
    %v120 = vsel %vm46, %v115, 0.0
    %v121 = vadd.f32 %v119, %v120
    %v122 = vsel %vm46, %v116, 0.0
    %v123 = vadd.f32 %v121, %v122
    %v124 = vmul.f32 %v123, %v54
    %v125 = vsub.f32 %v113, %v124
    %v126 = vsub.f32 %v114, %v124
    %v127 = vsub.f32 %v115, %v124
    %v128 = vsub.f32 %v116, %v124
    %v129 = vmul.f32 %v125, %v125
    %v130 = vmul.f32 %v126, %v126
    %v131 = vmul.f32 %v127, %v127
    %v132 = vmul.f32 %v128, %v128
    %v133 = vsel %vm46, %v129, 0.0
    %v134 = vsel %vm46, %v130, 0.0
    %v135 = vadd.f32 %v133, %v134
    %v136 = vsel %vm46, %v131, 0.0
    %v137 = vadd.f32 %v135, %v136
    %v138 = vsel %vm46, %v132, 0.0
    %v139 = vadd.f32 %v137, %v138
    %v140 = vadd.f32 %v71, %v139
    %s141 = scalar_lea.vmem [#allocation2], 32
    %v142 = vld [vmem:[%s141] sm:$0xff]
    %v143 = vld [vmem:[%s141 + $0x8] sm:$0xff]
    %v144 = vld [vmem:[%s141 + $0x10] sm:$0xff]
    %v145 = vld [vmem:[%s141 + $0x18] sm:$0xff]
    %v146 = vsub.f32 %v142, %v124
    %v147 = vsub.f32 %v143, %v124
    %v148 = vsub.f32 %v144, %v124
    %v149 = vsub.f32 %v145, %v124
    %v150 = vmul.f32 %v146, %v125
    %v151 = vmul.f32 %v147, %v126
    %v152 = vmul.f32 %v148, %v127
    %v153 = vmul.f32 %v149, %v128
    %v154 = vsel %vm46, %v150, 0.0
    %v155 = vsel %vm46, %v151, 0.0
    %v156 = vadd.f32 %v154, %v155
    %v157 = vsel %vm46, %v152, 0.0
    %v158 = vadd.f32 %v156, %v157
    %v159 = vsel %vm46, %v153, 0.0
    %v160 = vadd.f32 %v158, %v159
    %v161 = vadd.f32 %v91, %v160
    %v162 = vmul.f32 %v146, %v146
    %v163 = vmul.f32 %v147, %v147
    %v164 = vmul.f32 %v148, %v148
    %v165 = vmul.f32 %v149, %v149
    %v166 = vsel %vm46, %v162, 0.0
    %v167 = vsel %vm46, %v163, 0.0
    %v168 = vadd.f32 %v166, %v167
    %v169 = vsel %vm46, %v164, 0.0
    %v170 = vadd.f32 %v168, %v169
    %v171 = vsel %vm46, %v165, 0.0
    %v172 = vadd.f32 %v170, %v171
    %v173 = vadd.f32 %v103, %v172
    %v174 = vsel %vm46, %v146, 0.0
    %v175 = vsel %vm46, %v147, 0.0
    %v176 = vadd.f32 %v174, %v175
    %v177 = vsel %vm46, %v148, 0.0
    %v178 = vadd.f32 %v176, %v177
    %v179 = vsel %vm46, %v149, 0.0
    %v180 = vadd.f32 %v178, %v179
    %v181 = vadd.f32 %v111, %v180
    %v182 = vmul.f32 %v181, %v181
    %v183 = vmul.f32 %v182, 0.125
    %v184 = vsub.f32 %v173, %v183
    %185 = vst.msk [vmem:[%s2] sm:$0xff] %vm46, %v161
    %186 = vst.msk [vmem:[%s3] sm:$0xff] %vm46, %v184
    %187 = vst.msk [vmem:[%s4] sm:$0xff] %vm46, %v140
    // Predicated region
    $region18: #{wacc_pallas.1} parent=1 // pred_check
      _
    $region19: #{wacc_pallas.1} parent=1 // pred_check_branch
      %189 = sbr.rel (0) target = $region21
    $region20: #{wacc_pallas.1} parent=1 // pred_region
      _
    $region21: #{wacc_pallas.1} parent=1 // pred_fallthru
      _
    // Predicated region
    $region22: #{wacc_pallas.1} parent=1 // pred_check
      _
    $region23: #{wacc_pallas.1} parent=1 // pred_check_branch
      %191 = sbr.rel (0) target = $region25
    $region24: #{wacc_pallas.1} parent=1 // pred_region
      _
    $region25: #{wacc_pallas.1} parent=1 // pred_fallthru
      _
    // Predicated region
    $region26: #{wacc_pallas.1} parent=1 // pred_check
      _
    $region27: #{wacc_pallas.1} parent=1 // pred_check_branch
      %193 = sbr.rel (0) target = $region29
    $region28: #{wacc_pallas.1} parent=1 // pred_region
      _
    $region29: #{wacc_pallas.1} parent=1 // pred_fallthru
      _
    // Predicated region
    $region30: #{wacc_pallas.1} parent=1 // pred_check
      _
    $region31: #{wacc_pallas.1} parent=1 // pred_check_branch
      %195 = sbr.rel (0) target = $region33
    $region32: #{wacc_pallas.1} parent=1 // pred_region
      _
    $region33: #{wacc_pallas.1} parent=1 // pred_fallthru
      _
    // Predicated region
    $region34: #{wacc_pallas.1} parent=1 // pred_check
      _
    $region35: #{wacc_pallas.1} parent=1 // pred_check_branch
      %197 = sbr.rel (0) target = $region37
    $region36: #{wacc_pallas.1} parent=1 // pred_region
      _
    $region37: #{wacc_pallas.1} parent=1 // pred_fallthru
      _
    // Predicated region
    $region38: #{wacc_pallas.1} parent=1 // pred_check
      _
    $region39: #{wacc_pallas.1} parent=1 // pred_check_branch
      %199 = sbr.rel (0) target = $region41
    $region40: #{wacc_pallas.1} parent=1 // pred_region
      _
    $region41: #{wacc_pallas.1} parent=1 // pred_fallthru
      _
    %200 = vsyncpa [#allocation3], 1
    %201 = vsyncpa [#allocation5], 1

</llo_original>
